<compile_context>
chip_gen: v7x
topology: tpu7x:2x2x1
jax: 0.10.0
libtpu: 0.0.40
codegen_flags: <defaults>
</compile_context>

<pallas_src>
import functools
import math

import jax
import jax.numpy as jnp
from jax.experimental import pallas as pl
from jax.experimental.pallas import tpu as pltpu


# ---------------------------------------------------------------------------
# Entmax 1.5 (exact, sort-based algorithm from the entmax/sparsemax package).
# Parameter transformation -> plain JAX glue, always in f32.
# ---------------------------------------------------------------------------
def entmax15(z, axis=-1):
    z = z / 2.0
    z = z - jnp.max(z, axis=axis, keepdims=True)
    d = z.shape[axis]
    zs = -jnp.sort(-z, axis=axis)                       # descending sort
    rho = jnp.arange(1, d + 1, dtype=z.dtype)
    mean = jnp.cumsum(zs, axis=axis) / rho
    mean_sq = jnp.cumsum(zs * zs, axis=axis) / rho
    ss = rho * (mean_sq - mean * mean)
    delta = (1.0 - ss) / rho
    delta_nz = jnp.clip(delta, 0.0, None)
    tau = mean - jnp.sqrt(delta_nz)
    support_size = jnp.sum((tau <= zs).astype(jnp.int32), axis=axis, keepdims=True)
    tau_star = jnp.take_along_axis(tau, support_size - 1, axis=axis)
    return jnp.clip(z - tau_star, 0.0, None) ** 2


# ---------------------------------------------------------------------------
# Pallas kernel: out_flat[b, k*D + d] = mask[k, d] * x[b, d]
#   mask_ref: (1, K*D)  f32 -- resident across the whole grid (constant index_map)
#   x_ref:    (TB, D)       -- one batch tile
#   o_ref:    (TB, K*D)     -- lane-dense flat output tile
# ---------------------------------------------------------------------------
def locality_kernel(mask_ref, x_ref, o_ref, *, k):
    x = x_ref[...].astype(jnp.float32)        # (TB, D)
    x_tiled = jnp.tile(x, (1, k))             # (TB, K*D): lane-axis replication
    o_ref[...] = (mask_ref[...] * x_tiled).astype(o_ref.dtype)


# ---------------------------------------------------------------------------
# Tile sizing helpers.
# ---------------------------------------------------------------------------
def _round_up(x, m):
    return ((x + m - 1) // m) * m


def _min_sublane(itemsize):
    # Minimum unmasked sublane tile per element width (f32:8, bf16:16, int8:32).
    return {4: 8, 2: 16, 1: 32}.get(itemsize, 8)


def _vmem_capacity_bytes():
    try:
        info = pltpu.get_tpu_info()
        cap = getattr(info, "vmem_capacity_bytes", None)
        if cap:
            return int(cap)
    except Exception:
        pass
    return 64 << 20  # conservative default (v7x has the smallest VMEM)


def _per_row_vmem(D, K, in_itemsize, out_itemsize):
    # x tile + flat out tile (both double-buffered by the auto-pipeline) plus
    # the f32 (TB, K*D) temporary materialized by jnp.tile inside the kernel.
    return 2 * D * in_itemsize + 2 * K * D * out_itemsize + K * D * 4


def _choose_batch_tile(B, K, D, in_itemsize, out_itemsize, sublane, vmem_budget):
    if B <= sublane:
        return B                                   # full-extent block is always legal
    per_row = _per_row_vmem(D, K, in_itemsize, out_itemsize)
    fixed = 2 * K * D * 4                          # resident f32 mask (double-buffered)
    cap = max(sublane, ((vmem_budget - fixed) // per_row) // sublane * sublane)
    cap = min(cap, 8192)
    # Prefer >= 2 grid steps: lets dimension_semantics=("parallel",) shard the
    # batch axis across v7x's 2 TensorCores and keeps the pipeline overlapped.
    half = _round_up(max(1, (B + 1) // 2), sublane)
    return int(min(cap, half))


# ---------------------------------------------------------------------------
# Forward wrapper.
# ---------------------------------------------------------------------------
def learnable_locality_forward(x, weight, out_dtype=None, tb=None):
    """x: (B, D), weight: (K, D)  ->  (B, K, D).

    Pass out_dtype=jnp.bfloat16 to halve the (dominant) HBM writeback if the
    consumer tolerates it; default keeps x.dtype for exact module semantics.
    """
    B, D = x.shape
    K, Dw = weight.shape
    assert D == Dw
    out_dtype = jnp.dtype(out_dtype) if out_dtype is not None else x.dtype

    # Parameter transform (JAX glue). Keep the mask in f32 — it is only (K, D)
    # and keeping it full precision avoids truncating the entmax probabilities
    # before the multiply. Flatten row-major: mask_flat[0, k*D + d] == mask[k, d].
    mask = entmax15(weight.astype(jnp.float32), axis=-1)
    mask_flat = mask.reshape(1, K * D)

    in_itemsize = jnp.dtype(x.dtype).itemsize
    out_itemsize = jnp.dtype(out_dtype).itemsize
    sublane = max(_min_sublane(in_itemsize), _min_sublane(out_itemsize))

    vmem_cap = _vmem_capacity_bytes()
    vmem_budget = min(28 << 20, vmem_cap // 2)

    TB = tb if tb is not None else _choose_batch_tile(
        B, K, D, in_itemsize, out_itemsize, sublane, vmem_budget)
    n_steps = pl.cdiv(B, TB)

    # Actual VMEM footprint at this TB (+ headroom) -> explicit, accurate limit.
    footprint = TB * _per_row_vmem(D, K, in_itemsize, out_itemsize) + 2 * K * D * 4
    vmem_limit = min(int(footprint) + (4 << 20), vmem_cap - (4 << 20))
    vmem_limit = max(vmem_limit, 1 << 20)

    cost = pl.CostEstimate(
        flops=B * K * D,
        transcendentals=0,
        bytes_accessed=B * D * in_itemsize + B * K * D * out_itemsize + K * D * 4,
    )

    flat = pl.pallas_call(
        functools.partial(locality_kernel, k=K),
        out_shape=jax.ShapeDtypeStruct((B, K * D), out_dtype),
        grid_spec=pltpu.PrefetchScalarGridSpec(
            num_scalar_prefetch=0,
            grid=(n_steps,),
            in_specs=[
                pl.BlockSpec((1, K * D), lambda b: (0, 0)),   # mask: resident, f32
                pl.BlockSpec((TB, D), lambda b: (b, 0)),      # x batch tile (ragged OK)
            ],
            out_specs=pl.BlockSpec((TB, K * D), lambda b: (b, 0)),
        ),
        compiler_params=pltpu.CompilerParams(
            dimension_semantics=("parallel",),   # shards batch tiles across TCs on v7x
            vmem_limit_bytes=vmem_limit,
        ),
        cost_estimate=cost,
    )(mask_flat, x)

    # Free (contiguous) reshape back to the module's (B, K, D) layout.
    return flat.reshape(B, K, D)


if __name__ == "__main__":
    # Small shapes consistent with the module: x is (batch, input_dim).
    B, D, K = 4, 32, 8

    key = jax.random.PRNGKey(0)
    k_w, k_x = jax.random.split(key)
    # torch.rand(k, input_dim) -> uniform [0, 1)
    weight = jax.random.uniform(k_w, (K, D), dtype=jnp.float32)
    x = jax.random.normal(k_x, (B, D), dtype=jnp.float32)

    out = jax.block_until_ready(learnable_locality_forward(x, weight))

    # Pure-JAX reference of the full forward pass.
    mask_ref = entmax15(weight, axis=-1)
    ref = mask_ref[None, :, :] * x[:, None, :]            # einsum('nd,bd->bnd')

    assert out.shape == (B, K, D)
    assert jnp.allclose(out, ref, atol=1e-6, rtol=1e-6), "mismatch vs reference"
    # Each mask row lies on the simplex (entmax output sums to 1).
    assert jnp.allclose(jnp.sum(mask_ref, axis=-1), 1.0, atol=1e-5)

    # Exercise the multi-tile + ragged-last-block path (B not a multiple of TB,
    # no wrapper-side pad/slice).
    B2 = 20
    x2 = jax.random.normal(jax.random.PRNGKey(1), (B2, D), dtype=jnp.float32)
    out2 = jax.block_until_ready(learnable_locality_forward(x2, weight, tb=8))
    ref2 = mask_ref[None, :, :] * x2[:, None, :]
    assert out2.shape == (B2, K, D)
    assert jnp.allclose(out2, ref2, atol=1e-6, rtol=1e-6), "mismatch (ragged tiled path)"

    print("KERNEL_OK")
</pallas_src>

<mosaic_0001>
module attributes {stable_mosaic.version = 11 : i64} {
  func.func @locality_kernel(%arg0: i32, %arg1: memref<1x256xf32, #tpu.memory_space<vmem>>, %arg2: memref<4x32xf32, #tpu.memory_space<vmem>>, %arg3: memref<4x256xf32, #tpu.memory_space<vmem>>) attributes {dimension_semantics = [#tpu.dimension_semantics<parallel>], iteration_bounds = array<i64: 1>, scalar_prefetch = 0 : i64, scratch_operands = 0 : i64, tpu.core_type = #tpu.core_type<tc>, window_params = [{pipeline_mode = #tpu.pipeline_mode<synchronous>, transform_indices = @transform_0, window_bounds = array<i64: 1, 256>}, {transform_indices = @transform_1, window_bounds = array<i64: 4, 32>}, {transform_indices = @transform_2, window_bounds = array<i64: 4, 256>}]} {
    %c0 = arith.constant 0 : index
    %c0_0 = arith.constant 0 : index
    %0 = vector.load %arg2[%c0, %c0_0] : memref<4x32xf32, #tpu.memory_space<vmem>>, vector<4x32xf32>
    %1 = tpu.concatenate %0, %0, %0, %0, %0, %0, %0, %0 in 1 : vector<4x32xf32>, vector<4x32xf32>, vector<4x32xf32>, vector<4x32xf32>, vector<4x32xf32>, vector<4x32xf32>, vector<4x32xf32>, vector<4x32xf32> -> vector<4x256xf32>
    %c0_1 = arith.constant 0 : index
    %c0_2 = arith.constant 0 : index
    %2 = vector.load %arg1[%c0_1, %c0_2] : memref<1x256xf32, #tpu.memory_space<vmem>>, vector<1x256xf32>
    %3 = vector.broadcast %2 : vector<1x256xf32> to vector<4x256xf32>
    %4 = arith.mulf %3, %1 : vector<4x256xf32>
    %c0_3 = arith.constant 0 : index
    %c0_4 = arith.constant 0 : index
    %5 = vector.load %arg3[%c0_3, %c0_4] : memref<4x256xf32, #tpu.memory_space<vmem>>, vector<4x256xf32>
    tpu.vector_store %arg3[%c0_3, %c0_4], %4 {strides = array<i32>} : memref<4x256xf32, #tpu.memory_space<vmem>>, vector<4x256xf32>,
    return
  }
  func.func @transform_0(%arg0: i32) -> (i32, i32) {
    %c0_i32 = arith.constant 0 : i32
    %c0_i32_0 = arith.constant 0 : i32
    %c0_i32_1 = arith.constant 0 : i32
    return %c0_i32, %c0_i32_0 : i32, i32
  }
  func.func @transform_1(%arg0: i32) -> (i32, i32) {
    %c0_i32 = arith.constant 0 : i32
    %c0_i32_0 = arith.constant 0 : i32
    return %arg0, %c0_i32 : i32, i32
  }
  func.func @transform_2(%arg0: i32) -> (i32, i32) {
    %c0_i32 = arith.constant 0 : i32
    %c0_i32_0 = arith.constant 0 : i32
    return %arg0, %c0_i32 : i32, i32
  }
}

</mosaic_0001>

<llo_original>
// kernel: tpu_custom_call.1
$region0: #{tpu_custom_call.1}
  #allocation0 [shape = 'u32[]', space=smem, size = 0x4, offset = 0x4, fixed_abs, tag = 'smem constant byte address 0x4 - core index']
  #allocation1 [shape = 'u32[144,128]{1,0:T(1,128)}', space=vmem, size = 0x12000, scoped, tag = 'internal scratch']
  %s0 = inlined_call_operand.hbm [shape: f32[1,256], index: 0, kind: input, shape index: {}]
  %s1 = inlined_call_operand.hbm [shape: f32[4,32], index: 1, kind: input, shape index: {}]
  %s2 = inlined_call_operand.hbm [shape: f32[4,256], index: 2, kind: output, shape index: {}]
  %s3 = sld [smem:[#allocation0]]
  $region26: #{tpu_custom_call.1} parent=0
    _
  %s5 = ssub.s32 1, %s3
  %s6 = scalar_select 0, %s5, %s3
  $region1: #{tpu_custom_call.1} parent=0
    #allocation2 [shape = 'u8[1024]{0}', space=vmem, size = 0x400, scoped, tag = 'input window, operand 0, single buffered']
    #allocation3 [shape = 's32[1]{0}', space=sflag, size = 0x4, scoped, tag = 'scoped memory for tpu_custom_call.1']
    #allocation4 [shape = 's32[1]{0}', space=sflag, size = 0x4, scoped, tag = 'scoped memory for tpu_custom_call.1']
    #allocation5 [shape = 'u8[2048]{0}', space=vmem, size = 0x800, scoped, tag = 'input window, operand 1, single buffered']
    #allocation6 [shape = 's32[1]{0}', space=sflag, size = 0x4, scoped, tag = 'scoped memory for tpu_custom_call.1']
    #allocation7 [shape = 'u8[4096]{0}', space=vmem, size = 0x1000, scoped, tag = 'output window, operand 0, single buffered']
    %7 = vsyncpa [#allocation3], 0
    %8 = vsyncpa [#allocation6], 0
    %9 = vsyncpa [#allocation4], 0
    // Predicated region
    $region2: #{tpu_custom_call.1} parent=1 // pred_check
      _
    $region3: #{tpu_custom_call.1} parent=1 // pred_check_branch
      %11 = sbr.rel (0) target = $region5
    $region4: #{tpu_custom_call.1} parent=1 // pred_region
      %s13 = ssub.s32 32, 32
      %14 = vsyncadd [#allocation3], %s13
      %s16 = sshll.u32 [#allocation2], 4
      %s17 = int_to_ptr.vmem [resolvable:$true] %s16
      %19 = dma.hbm_to_vmem [thread:$0]  %s0, 32, %s17, [#allocation3]
    $region5: #{tpu_custom_call.1} parent=1 // pred_fallthru
      _
    // Predicated region
    $region6: #{tpu_custom_call.1} parent=1 // pred_check
      _
    $region7: #{tpu_custom_call.1} parent=1 // pred_check_branch
      %21 = sbr.rel (0) target = $region9
    $region8: #{tpu_custom_call.1} parent=1 // pred_region
      %s23 = ssub.s32 64, 64
      %24 = vsyncadd [#allocation6], %s23
      %s26 = sshll.u32 [#allocation5], 4
      %s27 = int_to_ptr.vmem [resolvable:$true] %s26
      %29 = dma.hbm_to_vmem [thread:$0]  %s1, 64, %s27, [#allocation6]
    $region9: #{tpu_custom_call.1} parent=1 // pred_fallthru
      _
    // Predicated region
    $region10: #{tpu_custom_call.1} parent=1 // pred_check
      _
    $region11: #{tpu_custom_call.1} parent=1 // pred_check_branch
      %31 = sbr.rel (0) target = $region13
    $region12: #{tpu_custom_call.1} parent=1 // pred_region
      %32 = dma.done [#allocation3], 32
    $region13: #{tpu_custom_call.1} parent=1 // pred_fallthru
      _
    // Predicated region
    $region14: #{tpu_custom_call.1} parent=1 // pred_check
      _
    $region15: #{tpu_custom_call.1} parent=1 // pred_check_branch
      %34 = sbr.rel (0) target = $region17
    $region16: #{tpu_custom_call.1} parent=1 // pred_region
      %35 = dma.done [#allocation6], 64
    $region17: #{tpu_custom_call.1} parent=1 // pred_fallthru
      _
    %v36 = vld [vmem:[#allocation5] sm:$0xf]
    %38 = vrot.lane.b32.xlu0 %v36, 32
    %v39 = vpop.permute.xlu0 %38
    %41 = vrot.lane.b32.xlu0 %v36, 64
    %v42 = vpop.permute.xlu0 %41
    %44 = vrot.lane.b32.xlu0 %v36, 96
    %v45 = vpop.permute.xlu0 %44
    %vm47 = vcmask 261120
    %v48 = vsel %vm47, %v36, %v39
    %vm49 = vcmask 523264
    %v50 = vsel %vm49, %v48, %v42
    %vm51 = vcmask 785408
    %v52 = vsel %vm51, %v50, %v45
    %v53 = vld [vmem:[#allocation2] sm:$0x3]
    %v55 = vlaneseq
    %v56 = vshrl.u32 %v55, 7
    %v57 = vsub.s32 0, %v56
    %v58 = vrot.slane %v53, %v57
    %v59 = vlaneseq
    %v60 = vshrl.u32 %v59, 7
    %v61 = vsub.s32 1, %v60
    %v62 = vrot.slane %v53, %v61
    %v65 = vmul.f32 %v58, %v52
    %v66 = vmul.f32 %v62, %v52
    %v69 = vcombine.low %v65, %v66
    %71 = vst [vmem:[#allocation7] sm:$0xff] %v69
    // Predicated region
    $region18: #{tpu_custom_call.1} parent=1 // pred_check
      _
    $region19: #{tpu_custom_call.1} parent=1 // pred_check_branch
      %73 = sbr.rel (0) target = $region21
    $region20: #{tpu_custom_call.1} parent=1 // pred_region
      %s75 = ssub.s32 128, 128
      %76 = vsyncadd [#allocation4], %s75
      %s78 = sshll.u32 [#allocation7], 4
      %s79 = int_to_ptr.vmem [resolvable:$true] %s78
      %81 = dma.vmem_to_hbm [thread:$0]  %s79, 128, %s2, [#allocation4]
    $region21: #{tpu_custom_call.1} parent=1 // pred_fallthru
      _
    // Predicated region
    $region22: #{tpu_custom_call.1} parent=1 // pred_check
      _
    $region23: #{tpu_custom_call.1} parent=1 // pred_check_branch
      %83 = sbr.rel (0) target = $region25
    $region24: #{tpu_custom_call.1} parent=1 // pred_region
      %84 = dma.done [#allocation4], 128
    $region25: #{tpu_custom_call.1} parent=1 // pred_fallthru
      _
    %85 = vsyncpa [#allocation3], 1
    %86 = vsyncpa [#allocation6], 1
    %87 = vsyncpa [#allocation4], 1

</llo_original>
